<compile_context>
chip_gen: v6e
topology: v6e:2x2x1
jax: 0.10.0
libtpu: 0.0.40
codegen_flags: <defaults>
</compile_context>

<pallas_src>
import jax
import jax.numpy as jnp
from jax import lax
from jax.experimental import pallas as pl
from jax.experimental.pallas import tpu as pltpu


def _round_up(x, m):
    return ((x + m - 1) // m) * m


def backbone_update_kernel(s_ref, w_ref, b_ref, out_ref):
    # s_ref: (TILE_N, D)   w_ref: (D, 8)   b_ref: (1, 8)   out_ref: (12, TILE_N)
    s = s_ref[...]
    w = w_ref[...]

    # Linear: pred = s @ W^T + bias  (padded columns 6,7 of W / bias are 0).
    pred = jnp.dot(s, w, preferred_element_type=jnp.float32) + b_ref[...]   # (TILE_N, 8)

    # Flip the tiny result to feature-major so all following VPU math and the
    # output store are lane-dense (residue index on the 128-lane axis).
    pt = pred.T                                                             # (8, TILE_N)

    b = pt[0:1, :]
    c = pt[1:2, :]
    d = pt[2:3, :]

    # Non-normalized quaternion (1, b, c, d) -> rotation matrix using
    #   R = I + (2 / (1 + b^2 + c^2 + d^2)) * [[ -(c^2+d^2), bc - d, bd + c], ...]
    # which is algebraically identical to normalizing with rsqrt and applying
    # the standard unit-quaternion formula.
    n = 1.0 + b * b + c * c + d * d
    s2 = 2.0 / n                                  # EUP reciprocal path

    bb = b * b
    cc = c * c
    dd = d * d
    bc = b * c
    bd = b * d
    cd = c * d

    r00 = 1.0 - s2 * (cc + dd)
    r01 = s2 * (bc - d)
    r02 = s2 * (bd + c)
    r10 = s2 * (bc + d)
    r11 = 1.0 - s2 * (bb + dd)
    r12 = s2 * (cd - b)
    r20 = s2 * (bd - c)
    r21 = s2 * (cd + b)
    r22 = 1.0 - s2 * (bb + cc)

    # Assemble all 12 output rows (9 rotation entries + 3 translation comps)
    # and issue a single lane-dense full-block store.
    out_ref[...] = jnp.concatenate(
        [r00, r01, r02, r10, r11, r12, r20, r21, r22, pt[3:6, :]], axis=0
    )


def backbone_update(s, weight, bias):
    """s: (B, L, D) f32; weight: (6, D); bias: (6,).  Returns (rot, trans)."""
    B, L, D = s.shape
    N = B * L

    # Row-tile size: multiple of 128 so lane-dense output blocks are aligned,
    # large enough to amortize per-step overhead (~0.35 us/step), and tiny
    # compared to VMEM even when double-buffered (2 * TILE_N * D * 4 B).
    tile_n = min(1024, _round_up(N, 128))
    n_pad = _round_up(N, tile_n)

    s2 = s.reshape(N, D).astype(jnp.float32)
    if n_pad != N:
        s2 = jnp.pad(s2, ((0, n_pad - N), (0, 0)))

    # Pre-transposed weight / bias, zero-padded 6 -> 8 output features.
    w8 = jnp.zeros((D, 8), jnp.float32).at[:, :6].set(weight.T.astype(jnp.float32))
    b8 = jnp.zeros((1, 8), jnp.float32).at[0, :6].set(bias.astype(jnp.float32))

    grid = (n_pad // tile_n,)

    out = pl.pallas_call(
        backbone_update_kernel,
        out_shape=jax.ShapeDtypeStruct((12, n_pad), jnp.float32),
        grid=grid,
        in_specs=[
            pl.BlockSpec((tile_n, D), lambda i: (i, 0)),   # streamed activations
            pl.BlockSpec((D, 8), lambda i: (0, 0)),        # resident weight
            pl.BlockSpec((1, 8), lambda i: (0, 0)),        # resident bias
        ],
        out_specs=pl.BlockSpec((12, tile_n), lambda i: (0, i)),
        compiler_params=pltpu.CompilerParams(
            dimension_semantics=("parallel",),
        ),
        cost_estimate=pl.CostEstimate(
            flops=2 * n_pad * D * 8 + 40 * n_pad,
            transcendentals=n_pad,
            bytes_accessed=4 * (n_pad * D + 12 * n_pad + D * 8 + 8),
        ),
    )(s2, w8, b8)

    rot = out[:9, :N].T.reshape(B, L, 3, 3)
    trans = out[9:12, :N].T.reshape(B, L, 3)
    return rot, trans


def backbone_update_ref(s, weight, bias):
    """Pure-JAX reference of the PyTorch forward pass."""
    pred = jnp.einsum("bld,kd->blk", s, weight) + bias          # (B, L, 6)
    b, c, d = pred[..., 0], pred[..., 1], pred[..., 2]
    inv = lax.rsqrt(1.0 + b * b + c * c + d * d)
    a, b, c, d = inv, b * inv, c * inv, d * inv
    rot = jnp.stack(
        [a * a + b * b - c * c - d * d, 2 * (b * c - a * d), 2 * (b * d + a * c),
         2 * (b * c + a * d), a * a - b * b + c * c - d * d, 2 * (c * d - a * b),
         2 * (b * d - a * c), 2 * (c * d + a * b), a * a - b * b - c * c + d * d],
        axis=-1).reshape(*pred.shape[:-1], 3, 3)
    return rot, pred[..., 3:]


if __name__ == "__main__":
    B, L, D = 2, 8, 32   # indim = 32

    key = jax.random.PRNGKey(0)
    k_s, k_w, k_b = jax.random.split(key, 3)
    s = jax.random.normal(k_s, (B, L, D), dtype=jnp.float32)
    weight = 0.1 * jax.random.normal(k_w, (6, D), dtype=jnp.float32)
    bias = 0.1 * jax.random.normal(k_b, (6,), dtype=jnp.float32)

    rot, trans = backbone_update(s, weight, bias)
    jax.block_until_ready((rot, trans))

    rot_ref, trans_ref = backbone_update_ref(s, weight, bias)
    assert rot.shape == (B, L, 3, 3) and trans.shape == (B, L, 3)
    assert jnp.allclose(rot, rot_ref, atol=2e-5, rtol=2e-5)
    assert jnp.allclose(trans, trans_ref, atol=2e-5, rtol=2e-5)

    print("KERNEL_OK")
</pallas_src>

<mosaic_0001>
module attributes {stable_mosaic.version = 11 : i64} {
  func.func @backbone_update_kernel(%arg0: i32, %arg1: memref<128x32xf32, #tpu.memory_space<vmem>>, %arg2: memref<32x8xf32, #tpu.memory_space<vmem>>, %arg3: memref<1x8xf32, #tpu.memory_space<vmem>>, %arg4: memref<12x128xf32, #tpu.memory_space<vmem>>) attributes {dimension_semantics = [#tpu.dimension_semantics<parallel>], iteration_bounds = array<i64: 1>, scalar_prefetch = 0 : i64, scratch_operands = 0 : i64, tpu.core_type = #tpu.core_type<tc>, window_params = [{transform_indices = @transform_0, window_bounds = array<i64: 128, 32>}, {pipeline_mode = #tpu.pipeline_mode<synchronous>, transform_indices = @transform_1, window_bounds = array<i64: 32, 8>}, {pipeline_mode = #tpu.pipeline_mode<synchronous>, transform_indices = @transform_2, window_bounds = array<i64: 1, 8>}, {transform_indices = @transform_3, window_bounds = array<i64: 12, 128>}]} {
    %c0 = arith.constant 0 : index
    %c0_0 = arith.constant 0 : index
    %0 = vector.load %arg1[%c0, %c0_0] : memref<128x32xf32, #tpu.memory_space<vmem>>, vector<128x32xf32>
    %c0_1 = arith.constant 0 : index
    %c0_2 = arith.constant 0 : index
    %1 = vector.load %arg2[%c0_1, %c0_2] : memref<32x8xf32, #tpu.memory_space<vmem>>, vector<32x8xf32>
    %cst = arith.constant dense<0.000000e+00> : vector<128x8xf32>
    %2 = tpu.matmul %0, %1, %cst {dimension_numbers = #tpu.dot_dimension_numbers<[1], [0], [0], [1], [0, 0, 1, 1], [], []>} : vector<128x32xf32>, vector<32x8xf32>, vector<128x8xf32> -> vector<128x8xf32>
    %c0_3 = arith.constant 0 : index
    %c0_4 = arith.constant 0 : index
    %3 = vector.load %arg3[%c0_3, %c0_4] : memref<1x8xf32, #tpu.memory_space<vmem>>, vector<1x8xf32>
    %4 = vector.broadcast %3 : vector<1x8xf32> to vector<128x8xf32>
    %5 = arith.addf %2, %4 : vector<128x8xf32>
    %6 = tpu.transpose %5, [1, 0] : vector<128x8xf32> -> vector<8x128xf32>
    %7 = vector.extract_strided_slice %6 {offsets = [0, 0], sizes = [1, 128], strides = [1, 1]} : vector<8x128xf32> to vector<1x128xf32>
    %8 = vector.extract_strided_slice %6 {offsets = [1, 0], sizes = [1, 128], strides = [1, 1]} : vector<8x128xf32> to vector<1x128xf32>
    %9 = vector.extract_strided_slice %6 {offsets = [2, 0], sizes = [1, 128], strides = [1, 1]} : vector<8x128xf32> to vector<1x128xf32>
    %10 = arith.mulf %7, %7 : vector<1x128xf32>
    %cst_5 = arith.constant 1.000000e+00 : f32
    %11 = vector.broadcast %cst_5 : f32 to vector<1x128xf32>
    %12 = arith.addf %11, %10 : vector<1x128xf32>
    %13 = arith.mulf %8, %8 : vector<1x128xf32>
    %14 = arith.addf %12, %13 : vector<1x128xf32>
    %15 = arith.mulf %9, %9 : vector<1x128xf32>
    %16 = arith.addf %14, %15 : vector<1x128xf32>
    %cst_6 = arith.constant 2.000000e+00 : f32
    %17 = vector.broadcast %cst_6 : f32 to vector<1x128xf32>
    %18 = arith.divf %17, %16 : vector<1x128xf32>
    %19 = arith.mulf %7, %7 : vector<1x128xf32>
    %20 = arith.mulf %8, %8 : vector<1x128xf32>
    %21 = arith.mulf %9, %9 : vector<1x128xf32>
    %22 = arith.mulf %7, %8 : vector<1x128xf32>
    %23 = arith.mulf %7, %9 : vector<1x128xf32>
    %24 = arith.mulf %8, %9 : vector<1x128xf32>
    %25 = arith.addf %20, %21 : vector<1x128xf32>
    %26 = arith.mulf %18, %25 : vector<1x128xf32>
    %cst_7 = arith.constant 1.000000e+00 : f32
    %27 = vector.broadcast %cst_7 : f32 to vector<1x128xf32>
    %28 = arith.subf %27, %26 : vector<1x128xf32>
    %29 = arith.subf %22, %9 : vector<1x128xf32>
    %30 = arith.mulf %18, %29 : vector<1x128xf32>
    %31 = arith.addf %23, %8 : vector<1x128xf32>
    %32 = arith.mulf %18, %31 : vector<1x128xf32>
    %33 = arith.addf %22, %9 : vector<1x128xf32>
    %34 = arith.mulf %18, %33 : vector<1x128xf32>
    %35 = arith.addf %19, %21 : vector<1x128xf32>
    %36 = arith.mulf %18, %35 : vector<1x128xf32>
    %cst_8 = arith.constant 1.000000e+00 : f32
    %37 = vector.broadcast %cst_8 : f32 to vector<1x128xf32>
    %38 = arith.subf %37, %36 : vector<1x128xf32>
    %39 = arith.subf %24, %7 : vector<1x128xf32>
    %40 = arith.mulf %18, %39 : vector<1x128xf32>
    %41 = arith.subf %23, %8 : vector<1x128xf32>
    %42 = arith.mulf %18, %41 : vector<1x128xf32>
    %43 = arith.addf %24, %7 : vector<1x128xf32>
    %44 = arith.mulf %18, %43 : vector<1x128xf32>
    %45 = arith.addf %19, %20 : vector<1x128xf32>
    %46 = arith.mulf %18, %45 : vector<1x128xf32>
    %cst_9 = arith.constant 1.000000e+00 : f32
    %47 = vector.broadcast %cst_9 : f32 to vector<1x128xf32>
    %48 = arith.subf %47, %46 : vector<1x128xf32>
    %49 = vector.extract_strided_slice %6 {offsets = [3, 0], sizes = [3, 128], strides = [1, 1]} : vector<8x128xf32> to vector<3x128xf32>
    %50 = tpu.concatenate %28, %30, %32, %34, %38, %40, %42, %44, %48, %49 in 0 : vector<1x128xf32>, vector<1x128xf32>, vector<1x128xf32>, vector<1x128xf32>, vector<1x128xf32>, vector<1x128xf32>, vector<1x128xf32>, vector<1x128xf32>, vector<1x128xf32>, vector<3x128xf32> -> vector<12x128xf32>
    %c0_10 = arith.constant 0 : index
    %c0_11 = arith.constant 0 : index
    %51 = vector.load %arg4[%c0_10, %c0_11] : memref<12x128xf32, #tpu.memory_space<vmem>>, vector<12x128xf32>
    tpu.vector_store %arg4[%c0_10, %c0_11], %50 {strides = array<i32>} : memref<12x128xf32, #tpu.memory_space<vmem>>, vector<12x128xf32>,
    return
  }
  func.func @transform_0(%arg0: i32) -> (i32, i32) {
    %c0_i32 = arith.constant 0 : i32
    %c0_i32_0 = arith.constant 0 : i32
    return %arg0, %c0_i32 : i32, i32
  }
  func.func @transform_1(%arg0: i32) -> (i32, i32) {
    %c0_i32 = arith.constant 0 : i32
    %c0_i32_0 = arith.constant 0 : i32
    %c0_i32_1 = arith.constant 0 : i32
    return %c0_i32, %c0_i32_0 : i32, i32
  }
  func.func @transform_2(%arg0: i32) -> (i32, i32) {
    %c0_i32 = arith.constant 0 : i32
    %c0_i32_0 = arith.constant 0 : i32
    %c0_i32_1 = arith.constant 0 : i32
    return %c0_i32, %c0_i32_0 : i32, i32
  }
  func.func @transform_3(%arg0: i32) -> (i32, i32) {
    %c0_i32 = arith.constant 0 : i32
    %c0_i32_0 = arith.constant 0 : i32
    return %c0_i32, %arg0 : i32, i32
  }
}

</mosaic_0001>

<llo_original>
// kernel: tpu_custom_call.1
$region0: #{tpu_custom_call.1}
  #allocation0 [shape = 'u32[]', space=smem, size = 0x4, offset = 0x4, fixed_abs, tag = 'smem constant byte address 0x4 - core index']
  #allocation1 [shape = 'u32[144,128]{1,0:T(1,128)}', space=vmem, size = 0x12000, scoped, tag = 'internal scratch']
  %s0 = inlined_call_operand.vmem [shape: f32[128,32], index: 0, kind: input, shape index: {}]
  %s1 = inlined_call_operand.vmem [shape: f32[32,8], index: 1, kind: input, shape index: {}]
  %s2 = inlined_call_operand.vmem [shape: f32[1,8], index: 2, kind: input, shape index: {}]
  %s3 = inlined_call_operand.hbm [shape: f32[12,128], index: 3, kind: output, shape index: {}]
  %s4 = sld [smem:[#allocation0]]
  $region22: #{tpu_custom_call.1} parent=0
    _
  %s6 = ssub.s32 1, %s4
  %s7 = scalar_select 0, %s6, %s4
  $region1: #{tpu_custom_call.1} parent=0
    #allocation2 [shape = 'u8[8192]{0}', space=vmem, size = 0x2000, scoped, tag = 'output window, operand 0, single buffered']
    #allocation3 [shape = 's32[1]{0}', space=sflag, size = 0x4, scoped, tag = 'scoped memory for tpu_custom_call.1']
    %8 = vsyncpa [#allocation3], 0
    // Predicated region
    $region2: #{tpu_custom_call.1} parent=1 // pred_check
      _
    $region3: #{tpu_custom_call.1} parent=1 // pred_check_branch
      %10 = sbr.rel (0) target = $region5
    $region4: #{tpu_custom_call.1} parent=1 // pred_region
      _
    $region5: #{tpu_custom_call.1} parent=1 // pred_fallthru
      _
    // Predicated region
    $region6: #{tpu_custom_call.1} parent=1 // pred_check
      _
    $region7: #{tpu_custom_call.1} parent=1 // pred_check_branch
      %12 = sbr.rel (0) target = $region9
    $region8: #{tpu_custom_call.1} parent=1 // pred_region
      _
    $region9: #{tpu_custom_call.1} parent=1 // pred_fallthru
      _
    // Predicated region
    $region10: #{tpu_custom_call.1} parent=1 // pred_check
      _
    $region11: #{tpu_custom_call.1} parent=1 // pred_check_branch
      %14 = sbr.rel (0) target = $region13
    $region12: #{tpu_custom_call.1} parent=1 // pred_region
      _
    $region13: #{tpu_custom_call.1} parent=1 // pred_fallthru
      _
    %v15 = vld [vmem:[%s0] sm:$0xff]
    %v16 = vld [vmem:[%s0 + $0x8] sm:$0xff]
    %v17 = vld [vmem:[%s0 + $0x10] sm:$0xff]
    %v18 = vld [vmem:[%s0 + $0x18] sm:$0xff]
    %v19 = vld [vmem:[%s0 + $0x20] sm:$0xff]
    %v20 = vld [vmem:[%s0 + $0x28] sm:$0xff]
    %v21 = vld [vmem:[%s0 + $0x30] sm:$0xff]
    %v22 = vld [vmem:[%s0 + $0x38] sm:$0xff]
    %v23 = vld [vmem:[%s0 + $0x40] sm:$0xff]
    %v24 = vld [vmem:[%s0 + $0x48] sm:$0xff]
    %v25 = vld [vmem:[%s0 + $0x50] sm:$0xff]
    %v26 = vld [vmem:[%s0 + $0x58] sm:$0xff]
    %v27 = vld [vmem:[%s0 + $0x60] sm:$0xff]
    %v28 = vld [vmem:[%s0 + $0x68] sm:$0xff]
    %v29 = vld [vmem:[%s0 + $0x70] sm:$0xff]
    %v30 = vld [vmem:[%s0 + $0x78] sm:$0xff]
    %v31 = vld [vmem:[%s1] sm:$0xff]
    %v32 = vld [vmem:[%s1 + $0x8] sm:$0xff]
    %v33 = vld [vmem:[%s1 + $0x10] sm:$0xff]
    %v34 = vld [vmem:[%s1 + $0x18] sm:$0xff]
    %v35 = vld [vmem:[%s2] sm:$0x1]
    %v37 = vlaneseq
    %v38 = vshrl.u32 %v37, 7
    %v39 = vsub.s32 0, %v38
    %v40 = vrot.slane %v35, %v39
    %vm42 = vcmask 261120
    %v44 = vsel %vm42, %v15, 0
    %v47 = vsel %vm42, %v16, 0
    %v50 = vsel %vm42, %v17, 0
    %v53 = vsel %vm42, %v18, 0
    %v56 = vsel %vm42, %v19, 0
    %v59 = vsel %vm42, %v20, 0
    %v62 = vsel %vm42, %v21, 0
    %v65 = vsel %vm42, %v22, 0
    %v68 = vsel %vm42, %v23, 0
    %v71 = vsel %vm42, %v24, 0
    %v74 = vsel %vm42, %v25, 0
    %v77 = vsel %vm42, %v26, 0
    %v80 = vsel %vm42, %v27, 0
    %v83 = vsel %vm42, %v28, 0
    %v86 = vsel %vm42, %v29, 0
    %v89 = vsel %vm42, %v30, 0
    %91 = vmatprep.subr.mxu0 0.0
    %92 = vmatpush1.msra.mxu0 0.0
    %93 = vmatprep.subr.mxu0 0.0
    %94 = vmatpush1.msra.mxu0 0.0
    %95 = vmatprep.subr.mxu0 0.0
    %96 = vmatpush1.msra.mxu0 0.0
    %97 = vmatprep.subr.mxu0 0.0
    %98 = vmatpush1.msra.mxu0 0.0
    %99 = vmatprep.subr.mxu0 0.0
    %100 = vmatpush1.msra.mxu0 0.0
    %101 = vmatprep.subr.mxu0 0.0
    %102 = vmatpush1.msra.mxu0 0.0
    %103 = vmatprep.subr.mxu0 0.0
    %104 = vmatpush1.msra.mxu0 0.0
    %105 = vmatprep.subr.mxu0 0.0
    %106 = vmatpush1.msra.mxu0 0.0
    %107 = vmatprep.subr.mxu0 0.0
    %108 = vmatpush1.msra.mxu0 0.0
    %109 = vmatprep.subr.mxu0 0.0
    %110 = vmatpush1.msra.mxu0 0.0
    %111 = vmatprep.subr.mxu0 0.0
    %112 = vmatpush1.msra.mxu0 0.0
    %113 = vmatprep.subr.mxu0 0.0
    %114 = vmatpush1.msra.mxu0 0.0
    %115 = vmatprep.subr.mxu0 0.0
    %116 = vmatpush1.msra.mxu0 %v34
    %117 = vmatprep.subr.mxu0 0.0
    %118 = vmatpush1.msra.mxu0 %v33
    %119 = vmatprep.subr.mxu0 0.0
    %120 = vmatpush1.msra.mxu0 %v32
    %121 = vmatprep.subr.mxu0 0.0
    %122 = vmatpush1.msra.mxu0 %v31
    %123 = vmatprep.subr.mxu0 0.0
    %124 = vmatpush2.msra.mxu0 0.0
    %125 = vmatprep.subr.mxu0 0.0
    %126 = vmatpush2.msra.mxu0 0.0
    %127 = vmatprep.subr.mxu0 0.0
    %128 = vmatpush2.msra.mxu0 0.0
    %129 = vmatprep.subr.mxu0 0.0
    %130 = vmatpush2.msra.mxu0 0.0
    %131 = vmatprep.subr.mxu0 0.0
    %132 = vmatpush2.msra.mxu0 0.0
    %133 = vmatprep.subr.mxu0 0.0
    %134 = vmatpush2.msra.mxu0 0.0
    %135 = vmatprep.subr.mxu0 0.0
    %136 = vmatpush2.msra.mxu0 0.0
    %137 = vmatprep.subr.mxu0 0.0
    %138 = vmatpush2.msra.mxu0 0.0
    %139 = vmatprep.subr.mxu0 0.0
    %140 = vmatpush2.msra.mxu0 0.0
    %141 = vmatprep.subr.mxu0 0.0
    %142 = vmatpush2.msra.mxu0 0.0
    %143 = vmatprep.subr.mxu0 0.0
    %144 = vmatpush2.msra.mxu0 0.0
    %145 = vmatprep.subr.mxu0 0.0
    %146 = vmatpush2.msra.mxu0 0.0
    %147 = vmatprep.subr.mxu0 0.0
    %148 = vmatpush2.msra.mxu0 0.0
    %149 = vmatprep.subr.mxu0 0.0
    %150 = vmatpush2.msra.mxu0 0.0
    %151 = vmatprep.subr.mxu0 0.0
    %152 = vmatpush2.msra.mxu0 0.0
    %153 = vmatprep.subr.mxu0 0.0
    %154 = vmatpush2.msra.mxu0 0.0
    %155 = vmatprep.mubr.f32.mxu0 0.0
    %156 = vmatmul.mubr.f32.gmra.mxu0 %v44
    %v157 = vpop.f32.mrf.mxu0
    %v158 = vadd.f32 %v40, %v157
    %v159 = vpop.f32.mrf.mxu0
    %160 = vmatprep.mubr.f32.mxu0 0.0
    %161 = vmatmul.mubr.f32.gmra.mxu0 %v47
    %v162 = vpop.f32.mrf.mxu0
    %v163 = vadd.f32 %v40, %v162
    %v164 = vpop.f32.mrf.mxu0
    %165 = vmatprep.mubr.f32.mxu0 0.0
    %166 = vmatmul.mubr.f32.gmra.mxu0 %v50
    %v167 = vpop.f32.mrf.mxu0
    %v168 = vadd.f32 %v40, %v167
    %v169 = vpop.f32.mrf.mxu0
    %170 = vmatprep.mubr.f32.mxu0 0.0
    %171 = vmatmul.mubr.f32.gmra.mxu0 %v53
    %v172 = vpop.f32.mrf.mxu0
    %v173 = vadd.f32 %v40, %v172
    %v174 = vpop.f32.mrf.mxu0
    %175 = vmatprep.mubr.f32.mxu0 0.0
    %176 = vmatmul.mubr.f32.gmra.mxu0 %v56
    %v177 = vpop.f32.mrf.mxu0
    %v178 = vadd.f32 %v40, %v177
    %v179 = vpop.f32.mrf.mxu0
    %180 = vmatprep.mubr.f32.mxu0 0.0
    %181 = vmatmul.mubr.f32.gmra.mxu0 %v59
    %v182 = vpop.f32.mrf.mxu0
    %v183 = vadd.f32 %v40, %v182
    %v184 = vpop.f32.mrf.mxu0
    %185 = vmatprep.mubr.f32.mxu0 0.0
    %186 = vmatmul.mubr.f32.gmra.mxu0 %v62
    %v187 = vpop.f32.mrf.mxu0
    %v188 = vadd.f32 %v40, %v187
    %v189 = vpop.f32.mrf.mxu0
    %190 = vmatprep.mubr.f32.mxu0 0.0
    %191 = vmatmul.mubr.f32.gmra.mxu0 %v65
    %v192 = vpop.f32.mrf.mxu0
    %v193 = vadd.f32 %v40, %v192
    %v194 = vpop.f32.mrf.mxu0
    %195 = vmatprep.mubr.f32.mxu0 0.0
    %196 = vmatmul.mubr.f32.gmra.mxu0 %v68
    %v197 = vpop.f32.mrf.mxu0
    %v198 = vadd.f32 %v40, %v197
    %v199 = vpop.f32.mrf.mxu0
    %200 = vmatprep.mubr.f32.mxu0 0.0
    %201 = vmatmul.mubr.f32.gmra.mxu0 %v71
    %v202 = vpop.f32.mrf.mxu0
    %v203 = vadd.f32 %v40, %v202
    %v204 = vpop.f32.mrf.mxu0
    %205 = vmatprep.mubr.f32.mxu0 0.0
    %206 = vmatmul.mubr.f32.gmra.mxu0 %v74
    %v207 = vpop.f32.mrf.mxu0
    %v208 = vadd.f32 %v40, %v207
    %v209 = vpop.f32.mrf.mxu0
    %210 = vmatprep.mubr.f32.mxu0 0.0
    %211 = vmatmul.mubr.f32.gmra.mxu0 %v77
    %v212 = vpop.f32.mrf.mxu0
    %v213 = vadd.f32 %v40, %v212
    %v214 = vpop.f32.mrf.mxu0
    %215 = vmatprep.mubr.f32.mxu0 0.0
    %216 = vmatmul.mubr.f32.gmra.mxu0 %v80
    %v217 = vpop.f32.mrf.mxu0
    %v218 = vadd.f32 %v40, %v217
    %v219 = vpop.f32.mrf.mxu0
    %220 = vmatprep.mubr.f32.mxu0 0.0
    %221 = vmatmul.mubr.f32.gmra.mxu0 %v83
    %v222 = vpop.f32.mrf.mxu0
    %v223 = vadd.f32 %v40, %v222
    %v224 = vpop.f32.mrf.mxu0
    %225 = vmatprep.mubr.f32.mxu0 0.0
    %226 = vmatmul.mubr.f32.gmra.mxu0 %v86
    %v227 = vpop.f32.mrf.mxu0
    %v228 = vadd.f32 %v40, %v227
    %v229 = vpop.f32.mrf.mxu0
    %230 = vmatprep.mubr.f32.mxu0 0.0
    %231 = vmatmul.mubr.f32.gmra.mxu0 %v89
    %v232 = vpop.f32.mrf.mxu0
    %v233 = vadd.f32 %v40, %v232
    %v234 = vpop.f32.mrf.mxu0
    %235 = vdwg.mxu0
    %236 = vxpose.xlu0.b32.start [1/16] %v158, 128
    %237 = vxpose.xlu0.b32.cont [2/16] %v163, 128
    %238 = vxpose.xlu0.b32.cont [3/16] %v168, 128
    %239 = vxpose.xlu0.b32.cont [4/16] %v173, 128
    %240 = vxpose.xlu0.b32.cont [5/16] %v178, 128
    %241 = vxpose.xlu0.b32.cont [6/16] %v183, 128
    %242 = vxpose.xlu0.b32.cont [7/16] %v188, 128
    %243 = vxpose.xlu0.b32.cont [8/16] %v193, 128
    %244 = vxpose.xlu0.b32.cont [9/16] %v198, 128
    %245 = vxpose.xlu0.b32.cont [10/16] %v203, 128
    %246 = vxpose.xlu0.b32.cont [11/16] %v208, 128
    %247 = vxpose.xlu0.b32.cont [12/16] %v213, 128
    %248 = vxpose.xlu0.b32.cont [13/16] %v218, 128
    %249 = vxpose.xlu0.b32.cont [14/16] %v223, 128
    %250 = vxpose.xlu0.b32.cont [15/16] %v228, 128
    %251 = vxpose.xlu0.b32.end [16/16] %v233, 128
    %v252 = vpop.trf.xlu0
    %v253 = vpop.trf.xlu0
    %v254 = vpop.trf.xlu0
    %v255 = vpop.trf.xlu0
    %v256 = vpop.trf.xlu0
    %v257 = vpop.trf.xlu0
    %v258 = vpop.trf.xlu0
    %v259 = vpop.trf.xlu0
    %v260 = vpop.trf.xlu0
    %v261 = vpop.trf.xlu0
    %v262 = vpop.trf.xlu0
    %v263 = vpop.trf.xlu0
    %v264 = vpop.trf.xlu0
    %v265 = vpop.trf.xlu0
    %v266 = vpop.trf.xlu0
    %v267 = vpop.trf.xlu0
    %v268 = vmul.f32 %v252, %v252
    %v269 = vadd.f32 %v268, 1.0
    %v271 = vrot.slane %v268, 1
    %v273 = vadd.f32 %v269, %v271
    %v274 = vrot.slane %v268, 2
    %v276 = vadd.f32 %v273, %v274
    %v277 = vrcp.pop %v276
    %v278 = vmul.f32 2.0, %v277
    %v280 = vrot.slane %v252, 1
    %v282 = vmul.f32 %v252, %v280
    %v283 = vrot.slane %v252, 2
    %v285 = vmul.f32 %v252, %v283
    %v286 = vadd.f32 %v268, %v271
    %v288 = vrot.slane %v286, 1
    %v290 = vmul.f32 %v278, %v288
    %v291 = vsub.f32 1.0, %v290
    %v292 = vsub.f32 %v282, %v283
    %v293 = vmul.f32 %v278, %v292
    %v294 = vadd.f32 %v285, %v280
    %v295 = vmul.f32 %v278, %v294
    %v296 = vadd.f32 %v282, %v283
    %v297 = vmul.f32 %v278, %v296
    %v298 = vadd.f32 %v268, %v274
    %v299 = vmul.f32 %v278, %v298
    %v300 = vsub.f32 1.0, %v299
    %v301 = vrot.slane %v252, 7
    %v303 = vsub.f32 %v282, %v301
    %v305 = vrot.slane %v303, 1
    %v307 = vmul.f32 %v278, %v305
    %v308 = vsub.f32 %v285, %v280
    %v309 = vmul.f32 %v278, %v308
    %v310 = vadd.f32 %v282, %v301
    %v312 = vrot.slane %v310, 1
    %v314 = vmul.f32 %v278, %v312
    %v315 = vmul.f32 %v278, %v286
    %v316 = vsub.f32 1.0, %v315
    %v318 = vrot.slane %v293, 7
    %v321 = vrot.slane %v295, 6
    %v324 = vrot.slane %v297, 5
    %v327 = vrot.slane %v300, 4
    %v330 = vrot.slane %v307, 3
    %v333 = vrot.slane %v309, 2
    %v336 = vrot.slane %v314, 1
    %vm338 = vcmask 1040384
    %v339 = vsel %vm338, %v291, %v318
    %vm340 = vcmask 1041408
    %v341 = vsel %vm340, %v339, %v321
    %vm342 = vcmask 1042432
    %v343 = vsel %vm342, %v341, %v324
    %vm344 = vcmask 1043456
    %v345 = vsel %vm344, %v343, %v327
    %vm346 = vcmask 1044480
    %v347 = vsel %vm346, %v345, %v330
    %vm348 = vcmask 1045504
    %v349 = vsel %vm348, %v347, %v333
    %vm350 = vcmask 1046528
    %v351 = vsel %vm350, %v349, %v336
    %v352 = vsel %vm338, %v316, %v283
    %353 = vst [vmem:[#allocation2] sm:$0xff] %v351
    %354 = vst [vmem:[#allocation2 + $0x8] sm:$0xf] %v352
    // Predicated region
    $region14: #{tpu_custom_call.1} parent=1 // pred_check
      _
    $region15: #{tpu_custom_call.1} parent=1 // pred_check_branch
      %356 = sbr.rel (0) target = $region17
    $region16: #{tpu_custom_call.1} parent=1 // pred_region
      %s358 = ssub.s32 256, 256
      %359 = vsyncadd [#allocation3], %s358
      %s360 = sshll.u32 [#allocation2], 4
      %s361 = int_to_ptr.vmem [resolvable:$true] %s360
      %366 = dma.vmem_to_hbm [thread:$0]  %s361, 256, %s3, [#allocation3], 128, 128, 8
    $region17: #{tpu_custom_call.1} parent=1 // pred_fallthru
      _
    // Predicated region
    $region18: #{tpu_custom_call.1} parent=1 // pred_check
      _
    $region19: #{tpu_custom_call.1} parent=1 // pred_check_branch
      %368 = sbr.rel (0) target = $region21
    $region20: #{tpu_custom_call.1} parent=1 // pred_region
      %369 = dma.done [#allocation3], 256
    $region21: #{tpu_custom_call.1} parent=1 // pred_fallthru
      _
    %370 = vsyncpa [#allocation3], 1

</llo_original>
